<compile_context>
chip_gen: v7x
topology: tpu7x:2x2x1
jax: 0.10.0
libtpu: 0.0.40
codegen_flags: <defaults>
</compile_context>

<pallas_src>
import functools
import math

import jax
import jax.numpy as jnp
from jax import lax
from jax.experimental import pallas as pl
from jax.experimental.pallas import tpu as pltpu


# ---------------------------------------------------------------------------
# helpers
# ---------------------------------------------------------------------------
def _round_up(x, m):
    return ((x + m - 1) // m) * m


def _cdiv(a, b):
    return -(-a // b)


def _vmem_budgets():
    """Return (vmem_limit_bytes, per-block byte budget), generation-aware."""
    cap = 64 << 20  # conservative fallback == v7x physical VMEM per TC
    try:
        info = pltpu.get_tpu_info()
        cap = int(getattr(info, "vmem_capacity_bytes", cap)) or cap
    except Exception:
        pass
    # Leave headroom for compiler scratch; 48 MiB on v7x, 64 MiB on v5e/v6e.
    vmem_limit = min((cap * 3) // 4, 64 << 20)
    # in + out double-buffered (~4 block buffers) plus f32 intermediates.
    block_budget = max(1 << 20, min(8 << 20, vmem_limit // 8))
    return vmem_limit, block_budget


def _pick_group(C, M):
    """Rows-per-block-row grouping g so that g*C is lane-dense (mult of 128)."""
    if C % 128 == 0:
        return 1
    g = 128 // math.gcd(C, 128)
    if g > 1 and M % g == 0 and g * C <= 2048:
        return g
    return 1   # fall back to full-dim (masked) last axis; still correct


def _pick_row_tile(Mg, Cg, itemsize, block_budget):
    """Row tile for the (Mg, Cg) channels_last layout."""
    bpe = max(4, itemsize)                       # stats are computed in f32
    tm = block_budget // (bpe * max(Cg, 1))
    tm = max(8, (tm // 8) * 8)                   # full sublane groups
    tm = min(tm, _round_up(Mg, 8))
    nb = _cdiv(Mg, tm)
    if 1 < nb < 4:                               # keep both v7x TCs busy
        tm = max(8, _round_up(_cdiv(Mg, 4), 8))
    return tm


def _pick_col_tile(L, C, itemsize, block_budget):
    """Lane tile for the (N, C, L) channels_first layout (L = H*W)."""
    if L < 128:
        return L                                 # full extent (masked lanes)
    bpe = max(4, itemsize)
    tl = block_budget // (bpe * max(C, 1))
    tl = max(128, (tl // 128) * 128)             # lane-dense multiple of 128
    tl = min(tl, _round_up(L, 128))
    nb = _cdiv(L, tl)
    if 1 < nb < 4:
        tl = max(128, _round_up(_cdiv(L, 4), 128))
    return tl


# ---------------------------------------------------------------------------
# Kernel 1: channels_last -- normalize groups of C channels along the lane axis
# ---------------------------------------------------------------------------
def _ln_rows_kernel(x_ref, w_ref, b_ref, o_ref, *, eps, C, g):
    # x_ref/o_ref: (tm, g*C) -- each row holds g independent groups of C channels
    # w_ref/b_ref: (1, g*C)  -- per-channel affine, tiled g times
    x = x_ref[...].astype(jnp.float32)
    inv_c = 1.0 / C
    if g == 1:
        mu = jnp.sum(x, axis=-1, keepdims=True) * inv_c
        d = x - mu
        var = jnp.sum(d * d, axis=-1, keepdims=True) * inv_c   # two-pass, resident
        y = d * lax.rsqrt(var + eps)
    else:
        Cg = g * C
        # Segmented-ones matrices built in-kernel from iota (no captured consts):
        #   S  (Cg, g): S[r, c]  = 1 if r // C == c   -> per-group reduce via MXU
        #   ST (g, Cg): transpose                      -> broadcast back via MXU
        r = lax.broadcasted_iota(jnp.int32, (Cg, g), 0) // C
        c = lax.broadcasted_iota(jnp.int32, (Cg, g), 1)
        S = (r == c).astype(jnp.float32)
        rT = lax.broadcasted_iota(jnp.int32, (g, Cg), 0)
        cT = lax.broadcasted_iota(jnp.int32, (g, Cg), 1) // C
        ST = (rT == cT).astype(jnp.float32)

        mu = jnp.dot(x, S, preferred_element_type=jnp.float32) * inv_c        # (tm, g)
        d = x - jnp.dot(mu, ST, preferred_element_type=jnp.float32)           # (tm, Cg)
        var = jnp.dot(d * d, S, preferred_element_type=jnp.float32) * inv_c   # (tm, g)
        rs = lax.rsqrt(var + eps)
        y = d * jnp.dot(rs, ST, preferred_element_type=jnp.float32)
    y = y * w_ref[...].astype(jnp.float32) + b_ref[...].astype(jnp.float32)
    o_ref[...] = y.astype(o_ref.dtype)


# ---------------------------------------------------------------------------
# Kernel 2: channels_first -- normalize over the channel (sublane) axis of a
#           (C, tl) block; flattened spatial dim stays lane-dense.
# ---------------------------------------------------------------------------
def _ln_cols_kernel(x_ref, w_ref, b_ref, o_ref, *, eps):
    # x_ref/o_ref: (C, tl) (batch dim squeezed)   w_ref/b_ref: (C, 1)
    x = x_ref[...].astype(jnp.float32)
    inv_c = 1.0 / x.shape[0]
    mu = jnp.sum(x, axis=0, keepdims=True) * inv_c            # sublane reduce
    d = x - mu
    var = jnp.sum(d * d, axis=0, keepdims=True) * inv_c       # two-pass, resident
    y = (d * lax.rsqrt(var + eps)) * w_ref[...].astype(jnp.float32) \
        + b_ref[...].astype(jnp.float32)
    o_ref[...] = y.astype(o_ref.dtype)


# ---------------------------------------------------------------------------
# wrappers
# ---------------------------------------------------------------------------
def layer_norm_channels_last(x, weight, bias, eps=1e-6):
    """x: (..., C), normalized over the last dim (== F.layer_norm)."""
    eps = float(eps)   # must be a static Python float (do not trace through jit)
    orig_shape = x.shape
    C = orig_shape[-1]
    M = 1
    for d in orig_shape[:-1]:
        M *= d

    g = _pick_group(C, M)
    Mg, Cg = M // g, g * C
    x2 = x.reshape(Mg, Cg)                       # free row-major relabel
    w2 = jnp.tile(weight.reshape(-1), g).reshape(1, Cg)
    b2 = jnp.tile(bias.reshape(-1), g).reshape(1, Cg)

    vmem_limit, block_budget = _vmem_budgets()
    tm = _pick_row_tile(Mg, Cg, x.dtype.itemsize, block_budget)

    out = pl.pallas_call(
        functools.partial(_ln_rows_kernel, eps=eps, C=C, g=g),
        out_shape=jax.ShapeDtypeStruct((Mg, Cg), x.dtype),
        grid=(pl.cdiv(Mg, tm),),                 # partial tail block is masked
        in_specs=[
            pl.BlockSpec((tm, Cg), lambda i: (i, 0)),
            pl.BlockSpec((1, Cg), lambda i: (0, 0)),
            pl.BlockSpec((1, Cg), lambda i: (0, 0)),
        ],
        out_specs=pl.BlockSpec((tm, Cg), lambda i: (i, 0)),
        compiler_params=pltpu.CompilerParams(
            dimension_semantics=("parallel",),
            vmem_limit_bytes=vmem_limit),
    )(x2, w2, b2)
    return out.reshape(orig_shape)


def layer_norm_channels_first(x, weight, bias, eps=1e-6):
    """x: (N, C, *spatial), normalized over dim 1."""
    eps = float(eps)   # must be a static Python float
    N, C = x.shape[0], x.shape[1]
    L = 1
    for d in x.shape[2:]:
        L *= d
    x3 = x.reshape(N, C, L)

    vmem_limit, block_budget = _vmem_budgets()
    tl = _pick_col_tile(L, C, x.dtype.itemsize, block_budget)

    out = pl.pallas_call(
        functools.partial(_ln_cols_kernel, eps=eps),
        out_shape=jax.ShapeDtypeStruct((N, C, L), x.dtype),
        grid=(N, pl.cdiv(L, tl)),                # both axes independent
        in_specs=[
            pl.BlockSpec((None, C, tl), lambda n, l: (n, 0, l)),
            pl.BlockSpec((C, 1), lambda n, l: (0, 0)),
            pl.BlockSpec((C, 1), lambda n, l: (0, 0)),
        ],
        out_specs=pl.BlockSpec((None, C, tl), lambda n, l: (n, 0, l)),
        compiler_params=pltpu.CompilerParams(
            dimension_semantics=("parallel", "parallel"),
            vmem_limit_bytes=vmem_limit),
    )(x3, weight.reshape(C, 1), bias.reshape(C, 1))
    return out.reshape(x.shape)


def layer_norm(x, weight, bias, eps=1e-6, data_format="channels_last"):
    if data_format == "channels_last":
        return layer_norm_channels_last(x, weight, bias, eps)
    elif data_format == "channels_first":
        return layer_norm_channels_first(x, weight, bias, eps)
    raise NotImplementedError(data_format)


# ---------------------------------------------------------------------------
# test
# ---------------------------------------------------------------------------
if __name__ == "__main__":
    key = jax.random.PRNGKey(0)
    k1, k2, k3, k4 = jax.random.split(key, 4)
    batch, C, H, W = 2, 4, 16, 16
    eps = 1e-6

    # non-trivial affine params so the scale/shift path is actually exercised
    weight = 1.0 + 0.1 * jax.random.normal(k2, (C,), jnp.float32)
    bias = 0.1 * jax.random.normal(k3, (C,), jnp.float32)

    # eps stays a static Python float: bind it with partial, never trace it.
    ln_cf = jax.jit(functools.partial(layer_norm, eps=eps,
                                      data_format="channels_first"))
    ln_cl = jax.jit(functools.partial(layer_norm, eps=eps,
                                      data_format="channels_last"))

    # --- channels_first: (N, C, H, W) ---
    x_cf = jax.random.normal(k1, (batch, C, H, W), jnp.float32)
    out_cf = ln_cf(x_cf, weight, bias)
    jax.block_until_ready(out_cf)
    assert out_cf.shape == x_cf.shape
    u = x_cf.mean(axis=1, keepdims=True)
    s = ((x_cf - u) ** 2).mean(axis=1, keepdims=True)
    ref_cf = (weight[None, :, None, None] * ((x_cf - u) / jnp.sqrt(s + eps))
              + bias[None, :, None, None])
    assert jnp.allclose(out_cf, ref_cf, atol=1e-5, rtol=1e-5), \
        float(jnp.max(jnp.abs(out_cf - ref_cf)))

    # --- channels_last: (N, H, W, C) ---
    x_cl = jax.random.normal(k4, (batch, H, W, C), jnp.float32)
    out_cl = ln_cl(x_cl, weight, bias)
    jax.block_until_ready(out_cl)
    assert out_cl.shape == x_cl.shape
    mu = x_cl.mean(axis=-1, keepdims=True)
    var = ((x_cl - mu) ** 2).mean(axis=-1, keepdims=True)
    ref_cl = (x_cl - mu) / jnp.sqrt(var + eps) * weight + bias
    assert jnp.allclose(out_cl, ref_cl, atol=1e-5, rtol=1e-5), \
        float(jnp.max(jnp.abs(out_cl - ref_cl)))

    print("KERNEL_OK")
</pallas_src>

<mosaic_0001>
module attributes {stable_mosaic.version = 11 : i64} {
  func.func @_ln_cols_kernel(%arg0: i32, %arg1: i32, %arg2: memref<1x4x256xf32, #tpu.memory_space<vmem>>, %arg3: memref<4x1xf32, #tpu.memory_space<vmem>>, %arg4: memref<4x1xf32, #tpu.memory_space<vmem>>, %arg5: memref<1x4x256xf32, #tpu.memory_space<vmem>>) attributes {dimension_semantics = [#tpu.dimension_semantics<parallel>, #tpu.dimension_semantics<parallel>], iteration_bounds = array<i64: 2, 1>, scalar_prefetch = 0 : i64, scratch_operands = 0 : i64, tpu.core_type = #tpu.core_type<tc>, window_params = [{transform_indices = @transform_0, window_bounds = array<i64: 1, 4, 256>}, {pipeline_mode = #tpu.pipeline_mode<synchronous>, transform_indices = @transform_1, window_bounds = array<i64: 4, 1>}, {pipeline_mode = #tpu.pipeline_mode<synchronous>, transform_indices = @transform_2, window_bounds = array<i64: 4, 1>}, {transform_indices = @transform_3, window_bounds = array<i64: 1, 4, 256>}]} {
    %c0 = arith.constant 0 : index
    %c0_0 = arith.constant 0 : index
    %c0_1 = arith.constant 0 : index
    %0 = vector.load %arg2[%c0, %c0_0, %c0_1] : memref<1x4x256xf32, #tpu.memory_space<vmem>>, vector<1x4x256xf32>
    %1 = vector.shape_cast %0 : vector<1x4x256xf32> to vector<4x256xf32>
    %cst = arith.constant dense<0.000000e+00> : vector<256xf32>
    %2 = vector.multi_reduction <add>, %1, %cst [0] : vector<4x256xf32> to vector<256xf32>
    %3 = vector.shape_cast %2 : vector<256xf32> to vector<1x256xf32>
    %cst_2 = arith.constant 2.500000e-01 : f32
    %4 = vector.broadcast %cst_2 : f32 to vector<1x256xf32>
    %5 = arith.mulf %3, %4 : vector<1x256xf32>
    %6 = vector.broadcast %5 : vector<1x256xf32> to vector<4x256xf32>
    %7 = arith.subf %1, %6 : vector<4x256xf32>
    %8 = arith.mulf %7, %7 : vector<4x256xf32>
    %cst_3 = arith.constant dense<0.000000e+00> : vector<256xf32>
    %9 = vector.multi_reduction <add>, %8, %cst_3 [0] : vector<4x256xf32> to vector<256xf32>
    %10 = vector.shape_cast %9 : vector<256xf32> to vector<1x256xf32>
    %cst_4 = arith.constant 2.500000e-01 : f32
    %11 = vector.broadcast %cst_4 : f32 to vector<1x256xf32>
    %12 = arith.mulf %10, %11 : vector<1x256xf32>
    %cst_5 = arith.constant 9.99999997E-7 : f32
    %13 = vector.broadcast %cst_5 : f32 to vector<1x256xf32>
    %14 = arith.addf %12, %13 : vector<1x256xf32>
    %15 = math.rsqrt %14 : vector<1x256xf32>
    %16 = vector.broadcast %15 : vector<1x256xf32> to vector<4x256xf32>
    %17 = arith.mulf %7, %16 : vector<4x256xf32>
    %c0_6 = arith.constant 0 : index
    %c0_7 = arith.constant 0 : index
    %18 = vector.load %arg3[%c0_6, %c0_7] : memref<4x1xf32, #tpu.memory_space<vmem>>, vector<4x1xf32>
    %19 = vector.broadcast %18 : vector<4x1xf32> to vector<4x256xf32>
    %20 = arith.mulf %17, %19 : vector<4x256xf32>
    %c0_8 = arith.constant 0 : index
    %c0_9 = arith.constant 0 : index
    %21 = vector.load %arg4[%c0_8, %c0_9] : memref<4x1xf32, #tpu.memory_space<vmem>>, vector<4x1xf32>
    %22 = vector.broadcast %21 : vector<4x1xf32> to vector<4x256xf32>
    %23 = arith.addf %20, %22 : vector<4x256xf32>
    %c0_10 = arith.constant 0 : index
    %c0_11 = arith.constant 0 : index
    %c0_12 = arith.constant 0 : index
    %24 = vector.load %arg5[%c0_10, %c0_11, %c0_12] : memref<1x4x256xf32, #tpu.memory_space<vmem>>, vector<1x4x256xf32>
    %25 = vector.shape_cast %24 : vector<1x4x256xf32> to vector<4x256xf32>
    %26 = vector.shape_cast %23 : vector<4x256xf32> to vector<1x4x256xf32>
    tpu.vector_store %arg5[%c0_10, %c0_11, %c0_12], %26 {strides = array<i32>} : memref<1x4x256xf32, #tpu.memory_space<vmem>>, vector<1x4x256xf32>,
    return
  }
  func.func @transform_0(%arg0: i32, %arg1: i32) -> (i32, i32, i32) {
    %c0_i32 = arith.constant 0 : i32
    %c0_i32_0 = arith.constant 0 : i32
    return %arg0, %c0_i32, %arg1 : i32, i32, i32
  }
  func.func @transform_1(%arg0: i32, %arg1: i32) -> (i32, i32) {
    %c0_i32 = arith.constant 0 : i32
    %c0_i32_0 = arith.constant 0 : i32
    %c0_i32_1 = arith.constant 0 : i32
    return %c0_i32, %c0_i32_0 : i32, i32
  }
  func.func @transform_2(%arg0: i32, %arg1: i32) -> (i32, i32) {
    %c0_i32 = arith.constant 0 : i32
    %c0_i32_0 = arith.constant 0 : i32
    %c0_i32_1 = arith.constant 0 : i32
    return %c0_i32, %c0_i32_0 : i32, i32
  }
  func.func @transform_3(%arg0: i32, %arg1: i32) -> (i32, i32, i32) {
    %c0_i32 = arith.constant 0 : i32
    %c0_i32_0 = arith.constant 0 : i32
    return %arg0, %c0_i32, %arg1 : i32, i32, i32
  }
}

</mosaic_0001>

<llo_original>
// kernel: layer_norm.1
$region0: #{layer_norm.1}
  #allocation0 [shape = 'u32[]', space=smem, size = 0x4, offset = 0x4, fixed_abs, tag = 'smem constant byte address 0x4 - core index']
  #allocation1 [shape = 'u32[144,128]{1,0:T(1,128)}', space=vmem, size = 0x12000, scoped, tag = 'internal scratch']
  %s0 = inlined_call_operand.vmem [shape: f32[2,4,256], index: 0, kind: input, shape index: {}]
  %s1 = inlined_call_operand.vmem [shape: f32[4,1], index: 1, kind: input, shape index: {}]
  %s2 = inlined_call_operand.vmem [shape: f32[4,1], index: 2, kind: input, shape index: {}]
  %s3 = inlined_call_operand.vmem [shape: f32[2,4,256], index: 3, kind: output, shape index: {}]
  %s4 = sld [smem:[#allocation0]]
  $region45: #{layer_norm.1} parent=0
    _
  %s6 = ssub.s32 1, %s4
  %s7 = scalar_select 0, %s6, %s4
  loop: start=0, step=1, limit=4
  $region2: #{layer_norm.1} parent=0 // loop_pre_header
    _
  $region3: #{layer_norm.1} parent=0 // loop_header
    %s9 = sphi 0, %s13
    %p10 = scmp.ge.s32.totalorder %s9, 4
    %s16 = sphi 0, %s28
    %s17 = sphi 0, %s24
    %s18 = sphi 0, %s16
    %s19 = sphi 0, %s17
    %s20 = sphi 0, %s18
    %s21 = sphi 0, %s19
    %s33 = sphi 0, %s35
    %s36 = sphi 0, %s33
    %s37 = sphi 0, %s36
    %s53 = sphi 0, %s37
    %s57 = sphi 0, %s57
    %s59 = sphi 0, %s57
    %s60 = sphi 0, %s59
    %s74 = sphi 0, %s60
    %s78 = sphi 0, %s78
    %s80 = sphi 0, %s78
    %s81 = sphi 0, %s80
    %s95 = sphi 0, %s81
    %s103 = sphi 0, %s105
    %s106 = sphi 0, %s103
    %s107 = sphi 0, %s106
    %s123 = sphi 0, %s107
  $region4: #{layer_norm.1} parent=0 // loop_header_branch
    %12 = sbr.rel (%p10) target = $region8
  $region5: #{layer_norm.1} parent=0 // loop_body
    %s14 = ssub.s32 %s9, 1
    %s15 = ssub.s32 %s9, 2
    %s22 = sadd.s32 1, %s17
    %p23 = scmp.ge.s32.totalorder %s22, 1
    %s24 = scalar_select %p23, 0, %s22
    %s25 = sadd.s32 1, %s16
    %s26 = scalar_select %p23, %s25, %s16
    %p27 = scmp.ge.s32.totalorder %s26, 2
    %s28 = scalar_select %p27, 0, %s26
    %s29 = ssub.s32 %s16, %s28
    %s30 = ssub.s32 %s17, %s24
    %s31 = sor.u32 %s29, %s30
    %p32 = scmp.eq.s32.totalorder %s31, 0
    %s34 = sadd.s32 %s33, 1
    %s35 = scalar_select %p32, %s33, %s34
    %p38 = pneg %p32
    %p39 = scmp.eq.s32.totalorder %s9, 1
    %p40 = por %p38, %p39
    %p41 = scmp.ne.s32.totalorder %s33, %s36
    %p42 = scmp.eq.s32.totalorder %s9, 0
    %p43 = por %p41, %p42
    %p44 = scmp.ne.s32.totalorder %s33, %s36
    %p45 = scmp.eq.s32.totalorder %s14, 1
    %p46 = por %p44, %p45
    %p47 = scmp.ne.s32.totalorder %s36, %s37
    %p48 = scmp.eq.s32.totalorder %s14, 0
    %p49 = por %p47, %p48
    %p50 = scmp.ne.s32.totalorder %s36, %s37
    %p51 = scmp.eq.s32.totalorder %s15, 1
    %p52 = por %p50, %p51
    %p54 = scmp.ne.s32.totalorder %s37, %s53
    %p55 = scmp.eq.s32.totalorder %s15, 0
    %p56 = por %p54, %p55
    %s58 = sadd.s32 %s57, 1
    %p61 = scmp.eq.s32.totalorder %s9, 1
    %p62 = scmp.ne.s32.totalorder %s57, %s59
    %p63 = scmp.eq.s32.totalorder %s9, 0
    %p64 = por %p62, %p63
    %p65 = scmp.ne.s32.totalorder %s57, %s59
    %p66 = scmp.eq.s32.totalorder %s14, 1
    %p67 = por %p65, %p66
    %p68 = scmp.ne.s32.totalorder %s59, %s60
    %p69 = scmp.eq.s32.totalorder %s14, 0
    %p70 = por %p68, %p69
    %p71 = scmp.ne.s32.totalorder %s59, %s60
    %p72 = scmp.eq.s32.totalorder %s15, 1
    %p73 = por %p71, %p72
    %p75 = scmp.ne.s32.totalorder %s60, %s74
    %p76 = scmp.eq.s32.totalorder %s15, 0
    %p77 = por %p75, %p76
    %s79 = sadd.s32 %s78, 1
    %p82 = scmp.eq.s32.totalorder %s9, 1
    %p83 = scmp.ne.s32.totalorder %s78, %s80
    %p84 = scmp.eq.s32.totalorder %s9, 0
    %p85 = por %p83, %p84
    %p86 = scmp.ne.s32.totalorder %s78, %s80
    %p87 = scmp.eq.s32.totalorder %s14, 1
    %p88 = por %p86, %p87
    %p89 = scmp.ne.s32.totalorder %s80, %s81
    %p90 = scmp.eq.s32.totalorder %s14, 0
    %p91 = por %p89, %p90
    %p92 = scmp.ne.s32.totalorder %s80, %s81
    %p93 = scmp.eq.s32.totalorder %s15, 1
    %p94 = por %p92, %p93
    %p96 = scmp.ne.s32.totalorder %s81, %s95
    %p97 = scmp.eq.s32.totalorder %s15, 0
    %p98 = por %p96, %p97
    %s99 = ssub.s32 %s16, %s28
    %s100 = ssub.s32 %s17, %s24
    %s101 = sor.u32 %s99, %s100
    %p102 = scmp.eq.s32.totalorder %s101, 0
    %s104 = sadd.s32 %s103, 1
    %s105 = scalar_select %p102, %s103, %s104
    %p108 = pneg %p102
    %p109 = scmp.eq.s32.totalorder %s9, 1
    %p110 = por %p108, %p109
    %p111 = scmp.ne.s32.totalorder %s103, %s106
    %p112 = scmp.eq.s32.totalorder %s9, 0
    %p113 = por %p111, %p112
    %p114 = scmp.ne.s32.totalorder %s103, %s106
    %p115 = scmp.eq.s32.totalorder %s14, 1
    %p116 = por %p114, %p115
    %p117 = scmp.ne.s32.totalorder %s106, %s107
    %p118 = scmp.eq.s32.totalorder %s14, 0
    %p119 = por %p117, %p118
    %p120 = scmp.ne.s32.totalorder %s106, %s107
    %p121 = scmp.eq.s32.totalorder %s15, 1
    %p122 = por %p120, %p121
    %p124 = scmp.ne.s32.totalorder %s107, %s123
    %p125 = scmp.eq.s32.totalorder %s15, 0
    %p126 = por %p124, %p125
    %p127 = scmp.le.s32.totalorder 1, %s9
    %p128 = scmp.lt.s32.totalorder %s9, 3
    %p129 = pnand %p127, %p128
    %p130 = pneg %p129
    // Predicated region
    $region9: #{layer_norm.1} parent=5 // pred_check
      _
    $region10: #{layer_norm.1} parent=5 // pred_check_branch
      %132 = sbr.rel (%p129) target = $region12
    $region11: #{layer_norm.1} parent=5 // pred_region
      %s133 = ssub.s32 %s9, 1
      // Predicated region
      $region13: #{layer_norm.1} parent=11 // pred_check
        %p134 = pneg %p70
      $region14: #{layer_norm.1} parent=11 // pred_check_branch
        %136 = sbr.rel (%p134) target = $region16
      $region15: #{layer_norm.1} parent=11 // pred_region
        _
      $region16: #{layer_norm.1} parent=11 // pred_fallthru
        _
      // Predicated region
      $region17: #{layer_norm.1} parent=11 // pred_check
        %p137 = pneg %p91
      $region18: #{layer_norm.1} parent=11 // pred_check_branch
        %139 = sbr.rel (%p137) target = $region20
      $region19: #{layer_norm.1} parent=11 // pred_region
        _
      $region20: #{layer_norm.1} parent=11 // pred_fallthru
        _
    $region12: #{layer_norm.1} parent=5 // pred_fallthru
      _
    %p140 = scmp.lt.s32.totalorder %s9, 2
    // Predicated region
    $region21: #{layer_norm.1} parent=5 // pred_check
      %p141 = pneg %p140
    $region22: #{layer_norm.1} parent=5 // pred_check_branch
      %143 = sbr.rel (%p141) target = $region24
    $region23: #{layer_norm.1} parent=5 // pred_region
      // Predicated region
      $region25: #{layer_norm.1} parent=23 // pred_check
        %p144 = pneg %p43
      $region26: #{layer_norm.1} parent=23 // pred_check_branch
        %146 = sbr.rel (%p144) target = $region28
      $region27: #{layer_norm.1} parent=23 // pred_region
        %s147 = smul.u32 2, %s17
        %p148 = scmp.lt.s32.totalorder %s16, 1
        %s149 = scalar_select %p148, %s16, 1
        %p150 = scmp.lt.s32.totalorder %s147, 1
        %s151 = scalar_select %p150, %s147, 1
        %s152 = smul.addr %s149, 2
        %s153 = sadd.s32 %s151, %s152
        %s154 = smul.addr %s153, 4
        %s155 = scalar_lea.vmem %s0, %s154
        %s156 = smul.u32 2, %s17
      $region28: #{layer_norm.1} parent=23 // pred_fallthru
        _
    $region24: #{layer_norm.1} parent=5 // pred_fallthru
      _
    %p157 = scmp.le.s32.totalorder 1, %s9
    %p158 = scmp.lt.s32.totalorder %s9, 3
    %p159 = pnand %p157, %p158
    %p160 = pneg %p159
    // Predicated region
    $region29: #{layer_norm.1} parent=5 // pred_check
      _
    $region30: #{layer_norm.1} parent=5 // pred_check_branch
      %162 = sbr.rel (%p159) target = $region32
    $region31: #{layer_norm.1} parent=5 // pred_region
      %s163 = ssub.s32 %s9, 1
      %s164 = smul.u32 2, %s19
      %p165 = scmp.lt.s32.totalorder %s18, 1
      %s166 = scalar_select %p165, %s18, 1
      %p167 = scmp.lt.s32.totalorder %s164, 1
      %s168 = scalar_select %p167, %s164, 1
      %s169 = smul.addr %s166, 2
      %s170 = sadd.s32 %s168, %s169
      %s171 = smul.addr %s170, 4
      %s172 = scalar_lea.vmem %s0, %s171
      %p173 = pneg %p49
      %p174 = pneg %p46
      %p175 = pneg %p70
      %p176 = pneg %p67
      %p177 = pneg %p91
      %p178 = pneg %p88
      %p179 = pneg %p119
      %p180 = pneg %p116
      %s181 = smul.u32 2, %s19
      %p182 = scmp.lt.s32.totalorder %s18, 1
      %s183 = scalar_select %p182, %s18, 1
      %p184 = scmp.lt.s32.totalorder %s181, 1
      %s185 = scalar_select %p184, %s181, 1
      %s186 = smul.addr %s183, 2
      %s187 = sadd.s32 %s185, %s186
      %s188 = smul.addr %s187, 4
      %s189 = scalar_lea.vmem %s3, %s188
      %s190 = smul.u32 2, %s19
      %p191 = scmp.lt.s32.totalorder %s18, 1
      %s192 = scalar_select %p191, %s18, 1
      %p193 = scmp.lt.s32.totalorder %s190, 1
      %s194 = scalar_select %p193, %s190, 1
      %s195 = smul.addr %s192, 2
      %s196 = sadd.s32 %s194, %s195
      %s197 = smul.addr %s196, 4
      %s198 = scalar_lea.vmem %s0, %s197
      %s199 = smul.u32 2, %s19
      %s200 = smul.u32 2, %s19
      %p201 = scmp.lt.s32.totalorder %s18, 1
      %s202 = scalar_select %p201, %s18, 1
      %p203 = scmp.lt.s32.totalorder %s200, 1
      %s204 = scalar_select %p203, %s200, 1
      %s205 = smul.addr %s202, 2
      %s206 = sadd.s32 %s204, %s205
      %s207 = smul.addr %s206, 4
      %s208 = scalar_lea.vmem %s3, %s207
      %s209 = smul.u32 2, %s19
      %v210 = vld [vmem:[%s198] sm:$0xff]
      %v212 = vcombine.high %v210, %v210
      %vm214 = vcmask 1043456
      %v215 = vsel %vm214, %v210, 0.0
      %v216 = vrot.slane %v215, 4
      %v217 = vadd.f32 %v215, %v216
      %v218 = vrot.slane %v217, 2
      %v219 = vadd.f32 %v217, %v218
      %v220 = vrot.slane %v219, 1
      %v221 = vadd.f32 %v219, %v220
      %v222 = vsel %vm214, %v212, 0.0
      %v223 = vrot.slane %v222, 4
      %v224 = vadd.f32 %v222, %v223
      %v225 = vrot.slane %v224, 2
      %v226 = vadd.f32 %v224, %v225
      %v227 = vrot.slane %v226, 1
      %v228 = vadd.f32 %v226, %v227
      %v229 = vmul.f32 %v221, 0.25
      %v230 = vmul.f32 %v228, 0.25
      %v233 = vcombine.low %v229, %v230
      %v235 = vsub.f32 %v210, %v233
      %v236 = vmul.f32 %v235, %v235
      %v238 = vcombine.high %v236, %v236
      %v240 = vsel %vm214, %v236, 0.0
      %v241 = vrot.slane %v240, 4
      %v242 = vadd.f32 %v240, %v241
      %v243 = vrot.slane %v242, 2
      %v244 = vadd.f32 %v242, %v243
      %v245 = vrot.slane %v244, 1
      %v246 = vadd.f32 %v244, %v245
      %v247 = vsel %vm214, %v238, 0.0
      %v248 = vrot.slane %v247, 4
      %v249 = vadd.f32 %v247, %v248
      %v250 = vrot.slane %v249, 2
      %v251 = vadd.f32 %v249, %v250
      %v252 = vrot.slane %v251, 1
      %v253 = vadd.f32 %v251, %v252
      %v254 = vmul.f32 %v246, 0.25
      %v255 = vmul.f32 %v253, 0.25
      %v256 = vadd.f32 %v254, 1e-06
      %v257 = vadd.f32 %v255, 1e-06
      %v258 = vrsqrt.pop %v256
      %v259 = vrsqrt.pop %v257
      %v262 = vcombine.low %v258, %v259
      %v264 = vmul.f32 %v235, %v262
      %v265 = vld [vmem:[%s1] sm:$0xf]
      %267 = vset.pattern.permute.xlu0 0
      %268 = vperm.xlu0 %267, %v265
      %v269 = vpop.permute.xlu0 %268
      %v271 = vunpack.c.l.s4 839922192
      %v272 = vunpack.c.0.s8 %v271
      %v273 = vlaneseq
      %v274 = vshrl.u32 %v273, 7
      %v275 = vsub.s32 %v272, %v274
      %v276 = vrot.slane %v269, %v275
      %v278 = vmul.f32 %v264, %v276
      %v279 = vld [vmem:[%s2] sm:$0xf]
      %281 = vset.pattern.permute.xlu0 0
      %282 = vperm.xlu0 %281, %v279
      %v283 = vpop.permute.xlu0 %282
      %v285 = vunpack.c.l.s4 839922192
      %v286 = vunpack.c.0.s8 %v285
      %v287 = vlaneseq
      %v288 = vshrl.u32 %v287, 7
      %v289 = vsub.s32 %v286, %v288
      %v290 = vrot.slane %v283, %v289
      %v292 = vadd.f32 %v278, %v290
      %293 = vst [vmem:[%s208] sm:$0xff] %v292
      %s294 = smul.u32 2, %s19
      %p295 = scmp.lt.s32.totalorder %s18, 1
      %s296 = scalar_select %p295, %s18, 1
      %p297 = scmp.lt.s32.totalorder %s294, 1
      %s298 = scalar_select %p297, %s294, 1
      %s299 = smul.addr %s296, 2
      %s300 = sadd.s32 %s298, %s299
      %s301 = smul.addr %s300, 4
      %s302 = scalar_lea.vmem %s3, %s301
      // Predicated region
      $region33: #{layer_norm.1} parent=31 // pred_check
        %p303 = pneg %p116
      $region34: #{layer_norm.1} parent=31 // pred_check_branch
        %305 = sbr.rel (%p303) target = $region36
      $region35: #{layer_norm.1} parent=31 // pred_region
        %s306 = smul.u32 2, %s19
      $region36: #{layer_norm.1} parent=31 // pred_fallthru
        _
    $region32: #{layer_norm.1} parent=5 // pred_fallthru
      _
    %p307 = scmp.le.s32.totalorder 2, %s9
    // Predicated region
    $region37: #{layer_norm.1} parent=5 // pred_check
      %p308 = pneg %p307
    $region38: #{layer_norm.1} parent=5 // pred_check_branch
      %310 = sbr.rel (%p308) target = $region40
    $region39: #{layer_norm.1} parent=5 // pred_region
      %s311 = ssub.s32 %s9, 2
      // Predicated region
      $region41: #{layer_norm.1} parent=39 // pred_check
        %p312 = pneg %p122
      $region42: #{layer_norm.1} parent=39 // pred_check_branch
        %314 = sbr.rel (%p312) target = $region44
      $region43: #{layer_norm.1} parent=39 // pred_region
        %s315 = smul.u32 2, %s21
        %p316 = scmp.lt.s32.totalorder %s20, 1
        %s317 = scalar_select %p316, %s20, 1
        %p318 = scmp.lt.s32.totalorder %s315, 1
        %s319 = scalar_select %p318, %s315, 1
        %s320 = smul.addr %s317, 2
        %s321 = sadd.s32 %s319, %s320
        %s322 = smul.addr %s321, 4
        %s323 = scalar_lea.vmem %s3, %s322
      $region44: #{layer_norm.1} parent=39 // pred_fallthru
        _
    $region40: #{layer_norm.1} parent=5 // pred_fallthru
      _
  $region6: #{layer_norm.1} parent=0 // loop_footer
    %s13 = sadd.s32 1, %s9
  $region7: #{layer_norm.1} parent=0 // loop_footer_branch
    %8 = sbr.rel target = $region3
  $region8: #{layer_norm.1} parent=0 // loop_exit
    _

</llo_original>
